<compile_context>
chip_gen: v5e
topology: v5e:2x2
jax: 0.10.0
libtpu: 0.0.40
codegen_flags: <defaults>
</compile_context>

<pallas_src>
import math

import jax
import jax.numpy as jnp
from jax.experimental import pallas as pl
from jax.experimental.pallas import tpu as pltpu

DRUGS_DIM = 12
SIDES_DIM = 20
IN_DIM = DRUGS_DIM + SIDES_DIM          # 32
LATENT = 32                             # latent_dim
FEATURE = 16                            # feature_dim
HEADS = 4
DQ = LATENT // HEADS                    # per-head dim = 8
N = 8                                   # rows per independent batch
OUT_COLS = FEATURE + IN_DIM             # 48 = [xfeat | rec] packed output

# ---- packed weights: each block on its own 128-lane-aligned slot -----------
_W1 = 0          # (32, 32)   l1 Linear
_MCAT = 128      # (32, 128)  per-head WQ_h @ WK_h^T  (kills in-kernel K.T)
_WV = 256        # (32, 32)   WV
_WL1 = 384       # (32, 32)   attention.l1
_W2 = 512        # (32, 16)   l2
_W23 = 640       # (32, 32)   W2 @ W3A   (l2 folded into l3[0])
_W3B = 768       # (32, 32)   l3[3]
_W_COLS = 896

# ---- packed per-feature vector rows (one (16, 32) array) -------------------
(_B1, _BN1_G, _BN1_B, _LN1_G, _LN1_B, _BL1, _LN2_G, _LN2_B,
 _B2, _B23, _BN3_G, _BN3_B, _B3B) = range(13)
_V_ROWS = 16

_SCR = LATENT // N   # 4: stride / chunk count of the torch head scramble


# ---------------------------------------------------------------------------
# in-kernel helpers (pure jnp, traced inside the Pallas body)
# ---------------------------------------------------------------------------
def _leaky_relu(x):
    return jnp.where(x > 0, x, 0.01 * x)


def _batchnorm_train(x, gamma, beta, eps=1e-5):
    # BatchNorm1d training-mode forward: biased batch statistics over axis 0.
    m = jnp.mean(x, axis=0, keepdims=True)
    v = jnp.mean((x - m) * (x - m), axis=0, keepdims=True)
    return (x - m) * jax.lax.rsqrt(v + eps) * gamma + beta


def _layernorm(x, gamma, beta, eps=1e-5):
    m = jnp.mean(x, axis=-1, keepdims=True)
    v = jnp.mean((x - m) * (x - m), axis=-1, keepdims=True)
    return (x - m) * jax.lax.rsqrt(v + eps) * gamma + beta


# ---------------------------------------------------------------------------
# Single fused kernel: l1 -> Attention -> l2 -> l3   (one grid step per batch)
# ---------------------------------------------------------------------------
def _encoder_kernel(x_ref, w_ref, vec_ref, out_ref, at_ref):
    f32 = jnp.float32
    vec = vec_ref[...]                       # (16, 32) all bias/scale vectors

    def wblk(off, width):                    # 128-lane-aligned weight block
        return w_ref[:, off:off + width]

    def vrow(i, width=LATENT):
        return vec[i:i + 1, 0:width]

    # --- l1: Linear -> BatchNorm(batch stats) -> LeakyReLU -------------------
    # TODO(synk): nn.Dropout is stochastic; treated as identity (inference).
    x = jnp.dot(x_ref[...], wblk(_W1, LATENT),
                preferred_element_type=f32) + vrow(_B1)
    x = _leaky_relu(_batchnorm_train(x, vrow(_BN1_G), vrow(_BN1_B)))

    # --- attention ------------------------------------------------------------
    # s_h = (x WQ_h)(x WK_h)^T = x (WQ_h WK_h^T) x^T; Mcat packs WQ_h WK_h^T,
    # so no per-head K transposes are needed in-kernel.
    xT = x.T                                                          # (32, N)
    g = jnp.dot(x, wblk(_MCAT, HEADS * LATENT),
                preferred_element_type=f32)                           # (N, 128)
    xv = jnp.dot(x, wblk(_WV, LATENT), preferred_element_type=f32)    # (N, 32)
    scale = 1.0 / math.sqrt(DQ)
    head_out = []
    for h in range(HEADS):
        s = jnp.dot(g[:, h * LATENT:(h + 1) * LATENT], xT,
                    preferred_element_type=f32) * scale               # (N, N)
        s = s - jnp.max(s, axis=-1, keepdims=True)
        p = jnp.exp(s)
        p = p * pl.reciprocal(jnp.sum(p, axis=-1, keepdims=True), approx=True)
        head_out.append(jnp.dot(p, xv[:, h * DQ:(h + 1) * DQ],
                                preferred_element_type=f32))          # (N, DQ)
    a = jnp.concatenate(head_out, axis=1)                             # (N, 32)

    # torch scramble att.transpose(1,2).reshape(N, heads*dv):
    #   scrambled[r, 8e+n] = a[n, 4r+e]   (== a.T row-major reflowed to (N,32))
    # emitted as ONE transpose + 4 sublane-strided reads of a VMEM scratch.
    at_ref[...] = a.T                                                 # (32, N)
    att = jnp.concatenate(
        [at_ref[pl.ds(e, N, stride=_SCR), :] for e in range(_SCR)], axis=1)

    # --- LN1 -> Linear -> LN2 (rest of Attention) -----------------------------
    x1 = _layernorm(att + x, vrow(_LN1_G), vrow(_LN1_B))
    o = jnp.dot(x1, wblk(_WL1, LATENT), preferred_element_type=f32) + vrow(_BL1)
    x2 = _layernorm(o + x1, vrow(_LN2_G), vrow(_LN2_B))

    # --- l2 (xfeat, off the critical path) + l3 with l2 folded into l3[0] -----
    xf = jnp.dot(x2, wblk(_W2, FEATURE),
                 preferred_element_type=f32) + vrow(_B2, FEATURE)
    h1 = jnp.dot(x2, wblk(_W23, LATENT),
                 preferred_element_type=f32) + vrow(_B23)
    h1 = _leaky_relu(_batchnorm_train(h1, vrow(_BN3_G), vrow(_BN3_B)))
    # TODO(synk): nn.Dropout treated as identity.
    rec = jnp.dot(h1, wblk(_W3B, IN_DIM),
                  preferred_element_type=f32) + vrow(_B3B, IN_DIM)

    # one lane-contiguous (N, 48) store; the wrapper splits xfeat / rec.
    out_ref[...] = jnp.concatenate([xf, rec], axis=1)


# ---------------------------------------------------------------------------
# One-time parameter packing (outside the hot path)
# ---------------------------------------------------------------------------
def pack_params(p):
    """Weights -> (32, 896) slab (128-lane-aligned blocks); vectors -> (16, 32)."""
    f32 = jnp.float32
    mcat = jnp.concatenate(
        [p['wq'][:, h * DQ:(h + 1) * DQ] @ p['wk'][:, h * DQ:(h + 1) * DQ].T
         for h in range(HEADS)], axis=1)                        # (32, 128)
    w23 = p['w2'] @ p['w3a']                                    # (32, 32)
    b23 = p['b2'] @ p['w3a'] + p['b3a']                         # (1, 32)

    W = jnp.zeros((LATENT, _W_COLS), f32)
    W = W.at[:, _W1:_W1 + LATENT].set(p['w1'])
    W = W.at[:, _MCAT:_MCAT + HEADS * LATENT].set(mcat)
    W = W.at[:, _WV:_WV + LATENT].set(p['wv'])
    W = W.at[:, _WL1:_WL1 + LATENT].set(p['wl1'])
    W = W.at[:, _W2:_W2 + FEATURE].set(p['w2'])
    W = W.at[:, _W23:_W23 + LATENT].set(w23)
    W = W.at[:, _W3B:_W3B + IN_DIM].set(p['w3b'])

    V = jnp.zeros((_V_ROWS, LATENT), f32)
    V = V.at[_B1, :].set(p['b1'][0])
    V = V.at[_BN1_G, :].set(p['bn1_g'][0])
    V = V.at[_BN1_B, :].set(p['bn1_b'][0])
    V = V.at[_LN1_G, :].set(p['ln1_g'][0])
    V = V.at[_LN1_B, :].set(p['ln1_b'][0])
    V = V.at[_BL1, :].set(p['bl1'][0])
    V = V.at[_LN2_G, :].set(p['ln2_g'][0])
    V = V.at[_LN2_B, :].set(p['ln2_b'][0])
    V = V.at[_B2, :FEATURE].set(p['b2'][0])
    V = V.at[_B23, :].set(b23[0])
    V = V.at[_BN3_G, :].set(p['bn3_g'][0])
    V = V.at[_BN3_B, :].set(p['bn3_b'][0])
    V = V.at[_B3B, :].set(p['b3b'][0])
    return W, V


# ---------------------------------------------------------------------------
# Wrapper: grid over independent batches; parameter slabs stay VMEM-resident
# ---------------------------------------------------------------------------
def encoder_connection_forward(drugs, sides, W, V):
    """drugs: (B, N, 12) or (N, 12); sides: (B, N, 20) or (N, 20)."""
    squeeze = drugs.ndim == 2
    if squeeze:
        drugs, sides = drugs[None], sides[None]
    x_in = jnp.concatenate([drugs, sides], axis=-1).astype(jnp.float32)  # (B,N,32)
    B = x_in.shape[0]

    out = pl.pallas_call(
        _encoder_kernel,
        grid=(B,),
        out_shape=jax.ShapeDtypeStruct((B, N, OUT_COLS), jnp.float32),
        in_specs=[
            pl.BlockSpec((None, N, IN_DIM), lambda b: (b, 0, 0)),
            pl.BlockSpec((LATENT, _W_COLS), lambda b: (0, 0)),   # resident
            pl.BlockSpec((_V_ROWS, LATENT), lambda b: (0, 0)),   # resident
        ],
        out_specs=pl.BlockSpec((None, N, OUT_COLS), lambda b: (b, 0, 0)),
        scratch_shapes=[pltpu.VMEM((LATENT, N), jnp.float32)],   # scramble scratch
        compiler_params=pltpu.CompilerParams(
            dimension_semantics=("parallel",)),   # v7x: batches across both TCs
    )(x_in, W, V)

    x_feat, rec = out[..., :FEATURE], out[..., FEATURE:]
    if squeeze:
        x_feat, rec = x_feat[0], rec[0]
    return x_feat, rec


# ---------------------------------------------------------------------------
# Deterministic parameter init (synthetic; shapes from the module __init__)
# ---------------------------------------------------------------------------
def init_params(key):
    ks = jax.random.split(key, 8)

    def lin(k, din, dout, scale=0.1):
        kw, kb = jax.random.split(k)
        return (scale * jax.random.normal(kw, (din, dout), jnp.float32),
                scale * jax.random.normal(kb, (1, dout), jnp.float32))

    w1, b1 = lin(ks[0], IN_DIM, LATENT)
    wq, _ = lin(ks[1], LATENT, LATENT)       # WQ/WK/WV have bias=False
    wk, _ = lin(ks[2], LATENT, LATENT)
    wv, _ = lin(ks[3], LATENT, LATENT)
    wl1, bl1 = lin(ks[4], LATENT, LATENT)
    w2, b2 = lin(ks[5], LATENT, FEATURE)
    w3a, b3a = lin(ks[6], FEATURE, LATENT)
    w3b, b3b = lin(ks[7], LATENT, IN_DIM)

    ones = lambda d: jnp.ones((1, d), jnp.float32)
    zeros = lambda d: jnp.zeros((1, d), jnp.float32)
    return dict(
        w1=w1, b1=b1, bn1_g=ones(LATENT), bn1_b=zeros(LATENT),
        wq=wq, wk=wk, wv=wv,
        ln1_g=ones(LATENT), ln1_b=zeros(LATENT),
        wl1=wl1, bl1=bl1,
        ln2_g=ones(LATENT), ln2_b=zeros(LATENT),
        w2=w2, b2=b2,
        w3a=w3a, b3a=b3a, bn3_g=ones(LATENT), bn3_b=zeros(LATENT),
        w3b=w3b, b3b=b3b)


# ---------------------------------------------------------------------------
# Pure-JAX reference (mirrors the PyTorch forward) for a sanity check
# ---------------------------------------------------------------------------
def reference_forward(drugs, sides, p):
    x = jnp.concatenate([drugs, sides], axis=1)
    x = x @ p['w1'] + p['b1']
    m = x.mean(0, keepdims=True)
    v = ((x - m) ** 2).mean(0, keepdims=True)
    x = (x - m) / jnp.sqrt(v + 1e-5) * p['bn1_g'] + p['bn1_b']
    x = jnp.where(x > 0, x, 0.01 * x)

    q = (x @ p['wq']).reshape(N, HEADS, DQ).transpose(1, 0, 2)
    k = (x @ p['wk']).reshape(N, HEADS, DQ).transpose(1, 0, 2)
    vv = (x @ p['wv']).reshape(N, HEADS, DQ).transpose(1, 0, 2)
    s = jnp.einsum('hnd,hmd->hnm', q, k) / math.sqrt(DQ)
    pm = jax.nn.softmax(s, axis=-1)
    att = jnp.einsum('hnm,hmd->hnd', pm, vv)
    att = jnp.swapaxes(att, 1, 2).reshape(N, HEADS * DQ)

    def ln(t, g, b):
        mm = t.mean(-1, keepdims=True)
        var = ((t - mm) ** 2).mean(-1, keepdims=True)
        return (t - mm) / jnp.sqrt(var + 1e-5) * g + b

    x1 = ln(att + x, p['ln1_g'], p['ln1_b'])
    out = x1 @ p['wl1'] + p['bl1']
    x2 = ln(out + x1, p['ln2_g'], p['ln2_b'])
    xf = x2 @ p['w2'] + p['b2']

    h = xf @ p['w3a'] + p['b3a']
    m = h.mean(0, keepdims=True)
    var = ((h - m) ** 2).mean(0, keepdims=True)
    h = (h - m) / jnp.sqrt(var + 1e-5) * p['bn3_g'] + p['bn3_b']
    h = jnp.where(h > 0, h, 0.01 * h)
    rec = h @ p['w3b'] + p['b3b']
    return xf, rec


if __name__ == "__main__":
    key = jax.random.PRNGKey(0)
    kd, ks_, kp = jax.random.split(key, 3)
    B = 4                                   # independent batches -> grid axis
    drugs = jax.random.normal(kd, (B, N, DRUGS_DIM), jnp.float32)
    sides = jax.random.normal(ks_, (B, N, SIDES_DIM), jnp.float32)
    params = init_params(kp)
    W, V = pack_params(params)              # one-time packing, off the hot path

    fwd = jax.jit(encoder_connection_forward)
    x_feat, rec = jax.block_until_ready(fwd(drugs, sides, W, V))

    refs = [reference_forward(drugs[b], sides[b], params) for b in range(B)]
    x_exp = jnp.stack([r[0] for r in refs])
    rec_exp = jnp.stack([r[1] for r in refs])

    assert x_feat.shape == (B, N, FEATURE) and rec.shape == (B, N, IN_DIM)
    assert bool(jnp.all(jnp.isfinite(x_feat))) and bool(jnp.all(jnp.isfinite(rec)))
    assert jnp.allclose(x_feat, x_exp, rtol=2e-2, atol=2e-2)
    assert jnp.allclose(rec, rec_exp, rtol=2e-2, atol=2e-2)
    print("KERNEL_OK")
</pallas_src>

<mosaic_0001>
module attributes {stable_mosaic.version = 11 : i64} {
  func.func @_encoder_kernel(%arg0: i32, %arg1: memref<1x8x32xf32, #tpu.memory_space<vmem>>, %arg2: memref<32x896xf32, #tpu.memory_space<vmem>>, %arg3: memref<16x32xf32, #tpu.memory_space<vmem>>, %arg4: memref<1x8x48xf32, #tpu.memory_space<vmem>>, %arg5: memref<32x8xf32, #tpu.memory_space<vmem>>) attributes {dimension_semantics = [#tpu.dimension_semantics<parallel>], iteration_bounds = array<i64: 4>, scalar_prefetch = 0 : i64, scratch_operands = 1 : i64, tpu.core_type = #tpu.core_type<tc>, window_params = [{transform_indices = @transform_0, window_bounds = array<i64: 1, 8, 32>}, {pipeline_mode = #tpu.pipeline_mode<synchronous>, transform_indices = @transform_1, window_bounds = array<i64: 32, 896>}, {pipeline_mode = #tpu.pipeline_mode<synchronous>, transform_indices = @transform_2, window_bounds = array<i64: 16, 32>}, {transform_indices = @transform_3, window_bounds = array<i64: 1, 8, 48>}]} {
    %c0 = arith.constant 0 : index
    %c0_0 = arith.constant 0 : index
    %0 = vector.load %arg3[%c0, %c0_0] : memref<16x32xf32, #tpu.memory_space<vmem>>, vector<16x32xf32>
    %c0_1 = arith.constant 0 : index
    %c0_2 = arith.constant 0 : index
    %c0_3 = arith.constant 0 : index
    %1 = vector.load %arg1[%c0_1, %c0_2, %c0_3] : memref<1x8x32xf32, #tpu.memory_space<vmem>>, vector<1x8x32xf32>
    %2 = vector.shape_cast %1 : vector<1x8x32xf32> to vector<8x32xf32>
    %c0_4 = arith.constant 0 : index
    %c0_5 = arith.constant 0 : index
    %3 = vector.load %arg2[%c0_4, %c0_5] : memref<32x896xf32, #tpu.memory_space<vmem>>, vector<32x32xf32>
    %cst = arith.constant dense<0.000000e+00> : vector<8x32xf32>
    %4 = tpu.matmul %2, %3, %cst {dimension_numbers = #tpu.dot_dimension_numbers<[1], [0], [0], [1], [0, 0, 1, 1], [], []>} : vector<8x32xf32>, vector<32x32xf32>, vector<8x32xf32> -> vector<8x32xf32>
    %5 = vector.extract_strided_slice %0 {offsets = [0, 0], sizes = [1, 32], strides = [1, 1]} : vector<16x32xf32> to vector<1x32xf32>
    %6 = vector.broadcast %5 : vector<1x32xf32> to vector<8x32xf32>
    %7 = arith.addf %4, %6 : vector<8x32xf32>
    %8 = vector.extract_strided_slice %0 {offsets = [1, 0], sizes = [1, 32], strides = [1, 1]} : vector<16x32xf32> to vector<1x32xf32>
    %9 = vector.extract_strided_slice %0 {offsets = [2, 0], sizes = [1, 32], strides = [1, 1]} : vector<16x32xf32> to vector<1x32xf32>
    %cst_6 = arith.constant dense<0.000000e+00> : vector<32xf32>
    %10 = vector.multi_reduction <add>, %7, %cst_6 [0] : vector<8x32xf32> to vector<32xf32>
    %11 = vector.shape_cast %10 : vector<32xf32> to vector<1x32xf32>
    %cst_7 = arith.constant 8.000000e+00 : f32
    %12 = vector.broadcast %cst_7 : f32 to vector<1x32xf32>
    %13 = arith.divf %11, %12 : vector<1x32xf32>
    %14 = vector.broadcast %13 : vector<1x32xf32> to vector<8x32xf32>
    %15 = arith.subf %7, %14 : vector<8x32xf32>
    %16 = vector.broadcast %13 : vector<1x32xf32> to vector<8x32xf32>
    %17 = arith.subf %7, %16 : vector<8x32xf32>
    %18 = arith.mulf %15, %17 : vector<8x32xf32>
    %cst_8 = arith.constant dense<0.000000e+00> : vector<32xf32>
    %19 = vector.multi_reduction <add>, %18, %cst_8 [0] : vector<8x32xf32> to vector<32xf32>
    %20 = vector.shape_cast %19 : vector<32xf32> to vector<1x32xf32>
    %cst_9 = arith.constant 8.000000e+00 : f32
    %21 = vector.broadcast %cst_9 : f32 to vector<1x32xf32>
    %22 = arith.divf %20, %21 : vector<1x32xf32>
    %23 = vector.broadcast %13 : vector<1x32xf32> to vector<8x32xf32>
    %24 = arith.subf %7, %23 : vector<8x32xf32>
    %cst_10 = arith.constant 9.99999974E-6 : f32
    %25 = vector.broadcast %cst_10 : f32 to vector<1x32xf32>
    %26 = arith.addf %22, %25 : vector<1x32xf32>
    %27 = math.rsqrt %26 : vector<1x32xf32>
    %28 = vector.broadcast %27 : vector<1x32xf32> to vector<8x32xf32>
    %29 = arith.mulf %24, %28 : vector<8x32xf32>
    %30 = vector.broadcast %8 : vector<1x32xf32> to vector<8x32xf32>
    %31 = arith.mulf %29, %30 : vector<8x32xf32>
    %32 = vector.broadcast %9 : vector<1x32xf32> to vector<8x32xf32>
    %33 = arith.addf %31, %32 : vector<8x32xf32>
    %cst_11 = arith.constant 0.000000e+00 : f32
    %34 = vector.broadcast %cst_11 : f32 to vector<8x32xf32>
    %35 = arith.cmpf ogt, %33, %34 : vector<8x32xf32>
    %cst_12 = arith.constant 0.00999999977 : f32
    %36 = vector.broadcast %cst_12 : f32 to vector<8x32xf32>
    %37 = arith.mulf %36, %33 : vector<8x32xf32>
    %38 = arith.select %35, %33, %37 : vector<8x32xi1>, vector<8x32xf32>
    %39 = tpu.transpose %38, [1, 0] : vector<8x32xf32> -> vector<32x8xf32>
    %c0_13 = arith.constant 0 : index
    %c128 = arith.constant 128 : index
    %40 = vector.load %arg2[%c0_13, %c128] : memref<32x896xf32, #tpu.memory_space<vmem>>, vector<32x128xf32>
    %cst_14 = arith.constant dense<0.000000e+00> : vector<8x128xf32>
    %41 = tpu.matmul %38, %40, %cst_14 {dimension_numbers = #tpu.dot_dimension_numbers<[1], [0], [0], [1], [0, 0, 1, 1], [], []>} : vector<8x32xf32>, vector<32x128xf32>, vector<8x128xf32> -> vector<8x128xf32>
    %c0_15 = arith.constant 0 : index
    %c256 = arith.constant 256 : index
    %42 = vector.load %arg2[%c0_15, %c256] : memref<32x896xf32, #tpu.memory_space<vmem>>, vector<32x32xf32>
    %cst_16 = arith.constant dense<0.000000e+00> : vector<8x32xf32>
    %43 = tpu.matmul %38, %42, %cst_16 {dimension_numbers = #tpu.dot_dimension_numbers<[1], [0], [0], [1], [0, 0, 1, 1], [], []>} : vector<8x32xf32>, vector<32x32xf32>, vector<8x32xf32> -> vector<8x32xf32>
    %44 = vector.extract_strided_slice %41 {offsets = [0, 0], sizes = [8, 32], strides = [1, 1]} : vector<8x128xf32> to vector<8x32xf32>
    %cst_17 = arith.constant dense<0.000000e+00> : vector<8x8xf32>
    %45 = tpu.matmul %44, %39, %cst_17 {dimension_numbers = #tpu.dot_dimension_numbers<[1], [0], [0], [1], [0, 0, 1, 1], [], []>} : vector<8x32xf32>, vector<32x8xf32>, vector<8x8xf32> -> vector<8x8xf32>
    %cst_18 = arith.constant 0.353553385 : f32
    %46 = vector.broadcast %cst_18 : f32 to vector<8x8xf32>
    %47 = arith.mulf %45, %46 : vector<8x8xf32>
    %cst_19 = arith.constant dense<0xFF800000> : vector<8xf32>
    %48 = vector.multi_reduction <maximumf>, %47, %cst_19 [1] : vector<8x8xf32> to vector<8xf32>
    %49 = vector.shape_cast %48 : vector<8xf32> to vector<8x1xf32>
    %50 = vector.broadcast %49 : vector<8x1xf32> to vector<8x8xf32>
    %51 = arith.subf %47, %50 : vector<8x8xf32>
    %52 = math.exp %51 : vector<8x8xf32>
    %cst_20 = arith.constant dense<0.000000e+00> : vector<8xf32>
    %53 = vector.multi_reduction <add>, %52, %cst_20 [1] : vector<8x8xf32> to vector<8xf32>
    %54 = vector.shape_cast %53 : vector<8xf32> to vector<8x1xf32>
    %55 = tpu.reciprocal %54 {approx = true} : vector<8x1xf32> -> vector<8x1xf32>
    %56 = vector.broadcast %55 : vector<8x1xf32> to vector<8x8xf32>
    %57 = arith.mulf %52, %56 : vector<8x8xf32>
    %58 = vector.extract_strided_slice %43 {offsets = [0, 0], sizes = [8, 8], strides = [1, 1]} : vector<8x32xf32> to vector<8x8xf32>
    %cst_21 = arith.constant dense<0.000000e+00> : vector<8x8xf32>
    %59 = tpu.matmul %57, %58, %cst_21 {dimension_numbers = #tpu.dot_dimension_numbers<[1], [0], [0], [1], [0, 0, 1, 1], [], []>} : vector<8x8xf32>, vector<8x8xf32>, vector<8x8xf32> -> vector<8x8xf32>
    %60 = vector.extract_strided_slice %41 {offsets = [0, 32], sizes = [8, 32], strides = [1, 1]} : vector<8x128xf32> to vector<8x32xf32>
    %cst_22 = arith.constant dense<0.000000e+00> : vector<8x8xf32>
    %61 = tpu.matmul %60, %39, %cst_22 {dimension_numbers = #tpu.dot_dimension_numbers<[1], [0], [0], [1], [0, 0, 1, 1], [], []>} : vector<8x32xf32>, vector<32x8xf32>, vector<8x8xf32> -> vector<8x8xf32>
    %cst_23 = arith.constant 0.353553385 : f32
    %62 = vector.broadcast %cst_23 : f32 to vector<8x8xf32>
    %63 = arith.mulf %61, %62 : vector<8x8xf32>
    %cst_24 = arith.constant dense<0xFF800000> : vector<8xf32>
    %64 = vector.multi_reduction <maximumf>, %63, %cst_24 [1] : vector<8x8xf32> to vector<8xf32>
    %65 = vector.shape_cast %64 : vector<8xf32> to vector<8x1xf32>
    %66 = vector.broadcast %65 : vector<8x1xf32> to vector<8x8xf32>
    %67 = arith.subf %63, %66 : vector<8x8xf32>
    %68 = math.exp %67 : vector<8x8xf32>
    %cst_25 = arith.constant dense<0.000000e+00> : vector<8xf32>
    %69 = vector.multi_reduction <add>, %68, %cst_25 [1] : vector<8x8xf32> to vector<8xf32>
    %70 = vector.shape_cast %69 : vector<8xf32> to vector<8x1xf32>
    %71 = tpu.reciprocal %70 {approx = true} : vector<8x1xf32> -> vector<8x1xf32>
    %72 = vector.broadcast %71 : vector<8x1xf32> to vector<8x8xf32>
    %73 = arith.mulf %68, %72 : vector<8x8xf32>
    %74 = vector.extract_strided_slice %43 {offsets = [0, 8], sizes = [8, 8], strides = [1, 1]} : vector<8x32xf32> to vector<8x8xf32>
    %cst_26 = arith.constant dense<0.000000e+00> : vector<8x8xf32>
    %75 = tpu.matmul %73, %74, %cst_26 {dimension_numbers = #tpu.dot_dimension_numbers<[1], [0], [0], [1], [0, 0, 1, 1], [], []>} : vector<8x8xf32>, vector<8x8xf32>, vector<8x8xf32> -> vector<8x8xf32>
    %76 = vector.extract_strided_slice %41 {offsets = [0, 64], sizes = [8, 32], strides = [1, 1]} : vector<8x128xf32> to vector<8x32xf32>
    %cst_27 = arith.constant dense<0.000000e+00> : vector<8x8xf32>
    %77 = tpu.matmul %76, %39, %cst_27 {dimension_numbers = #tpu.dot_dimension_numbers<[1], [0], [0], [1], [0, 0, 1, 1], [], []>} : vector<8x32xf32>, vector<32x8xf32>, vector<8x8xf32> -> vector<8x8xf32>
    %cst_28 = arith.constant 0.353553385 : f32
    %78 = vector.broadcast %cst_28 : f32 to vector<8x8xf32>
    %79 = arith.mulf %77, %78 : vector<8x8xf32>
    %cst_29 = arith.constant dense<0xFF800000> : vector<8xf32>
    %80 = vector.multi_reduction <maximumf>, %79, %cst_29 [1] : vector<8x8xf32> to vector<8xf32>
    %81 = vector.shape_cast %80 : vector<8xf32> to vector<8x1xf32>
    %82 = vector.broadcast %81 : vector<8x1xf32> to vector<8x8xf32>
    %83 = arith.subf %79, %82 : vector<8x8xf32>
    %84 = math.exp %83 : vector<8x8xf32>
    %cst_30 = arith.constant dense<0.000000e+00> : vector<8xf32>
    %85 = vector.multi_reduction <add>, %84, %cst_30 [1] : vector<8x8xf32> to vector<8xf32>
    %86 = vector.shape_cast %85 : vector<8xf32> to vector<8x1xf32>
    %87 = tpu.reciprocal %86 {approx = true} : vector<8x1xf32> -> vector<8x1xf32>
    %88 = vector.broadcast %87 : vector<8x1xf32> to vector<8x8xf32>
    %89 = arith.mulf %84, %88 : vector<8x8xf32>
    %90 = vector.extract_strided_slice %43 {offsets = [0, 16], sizes = [8, 8], strides = [1, 1]} : vector<8x32xf32> to vector<8x8xf32>
    %cst_31 = arith.constant dense<0.000000e+00> : vector<8x8xf32>
    %91 = tpu.matmul %89, %90, %cst_31 {dimension_numbers = #tpu.dot_dimension_numbers<[1], [0], [0], [1], [0, 0, 1, 1], [], []>} : vector<8x8xf32>, vector<8x8xf32>, vector<8x8xf32> -> vector<8x8xf32>
    %92 = vector.extract_strided_slice %41 {offsets = [0, 96], sizes = [8, 32], strides = [1, 1]} : vector<8x128xf32> to vector<8x32xf32>
    %cst_32 = arith.constant dense<0.000000e+00> : vector<8x8xf32>
    %93 = tpu.matmul %92, %39, %cst_32 {dimension_numbers = #tpu.dot_dimension_numbers<[1], [0], [0], [1], [0, 0, 1, 1], [], []>} : vector<8x32xf32>, vector<32x8xf32>, vector<8x8xf32> -> vector<8x8xf32>
    %cst_33 = arith.constant 0.353553385 : f32
    %94 = vector.broadcast %cst_33 : f32 to vector<8x8xf32>
    %95 = arith.mulf %93, %94 : vector<8x8xf32>
    %cst_34 = arith.constant dense<0xFF800000> : vector<8xf32>
    %96 = vector.multi_reduction <maximumf>, %95, %cst_34 [1] : vector<8x8xf32> to vector<8xf32>
    %97 = vector.shape_cast %96 : vector<8xf32> to vector<8x1xf32>
    %98 = vector.broadcast %97 : vector<8x1xf32> to vector<8x8xf32>
    %99 = arith.subf %95, %98 : vector<8x8xf32>
    %100 = math.exp %99 : vector<8x8xf32>
    %cst_35 = arith.constant dense<0.000000e+00> : vector<8xf32>
    %101 = vector.multi_reduction <add>, %100, %cst_35 [1] : vector<8x8xf32> to vector<8xf32>
    %102 = vector.shape_cast %101 : vector<8xf32> to vector<8x1xf32>
    %103 = tpu.reciprocal %102 {approx = true} : vector<8x1xf32> -> vector<8x1xf32>
    %104 = vector.broadcast %103 : vector<8x1xf32> to vector<8x8xf32>
    %105 = arith.mulf %100, %104 : vector<8x8xf32>
    %106 = vector.extract_strided_slice %43 {offsets = [0, 24], sizes = [8, 8], strides = [1, 1]} : vector<8x32xf32> to vector<8x8xf32>
    %cst_36 = arith.constant dense<0.000000e+00> : vector<8x8xf32>
    %107 = tpu.matmul %105, %106, %cst_36 {dimension_numbers = #tpu.dot_dimension_numbers<[1], [0], [0], [1], [0, 0, 1, 1], [], []>} : vector<8x8xf32>, vector<8x8xf32>, vector<8x8xf32> -> vector<8x8xf32>
    %108 = tpu.concatenate %59, %75, %91, %107 in 1 : vector<8x8xf32>, vector<8x8xf32>, vector<8x8xf32>, vector<8x8xf32> -> vector<8x32xf32>
    %109 = tpu.transpose %108, [1, 0] : vector<8x32xf32> -> vector<32x8xf32>
    %c0_37 = arith.constant 0 : index
    %c0_38 = arith.constant 0 : index
    %110 = vector.load %arg5[%c0_37, %c0_38] : memref<32x8xf32, #tpu.memory_space<vmem>>, vector<32x8xf32>
    tpu.vector_store %arg5[%c0_37, %c0_38], %109 {strides = array<i32>} : memref<32x8xf32, #tpu.memory_space<vmem>>, vector<32x8xf32>,
    %c0_39 = arith.constant 0 : index
    %c0_40 = arith.constant 0 : index
    %111 = tpu.strided_load %arg5[%c0_39, %c0_40] {strides = array<i32: 4, 1>} : memref<32x8xf32, #tpu.memory_space<vmem>>, vector<8x8xf32>
    %c1 = arith.constant 1 : index
    %c0_41 = arith.constant 0 : index
    %112 = tpu.strided_load %arg5[%c1, %c0_41] {strides = array<i32: 4, 1>} : memref<32x8xf32, #tpu.memory_space<vmem>>, vector<8x8xf32>
    %c2 = arith.constant 2 : index
    %c0_42 = arith.constant 0 : index
    %113 = tpu.strided_load %arg5[%c2, %c0_42] {strides = array<i32: 4, 1>} : memref<32x8xf32, #tpu.memory_space<vmem>>, vector<8x8xf32>
    %c3 = arith.constant 3 : index
    %c0_43 = arith.constant 0 : index
    %114 = tpu.strided_load %arg5[%c3, %c0_43] {strides = array<i32: 4, 1>} : memref<32x8xf32, #tpu.memory_space<vmem>>, vector<8x8xf32>
    %115 = tpu.concatenate %111, %112, %113, %114 in 1 : vector<8x8xf32>, vector<8x8xf32>, vector<8x8xf32>, vector<8x8xf32> -> vector<8x32xf32>
    %116 = arith.addf %115, %38 : vector<8x32xf32>
    %117 = vector.extract_strided_slice %0 {offsets = [3, 0], sizes = [1, 32], strides = [1, 1]} : vector<16x32xf32> to vector<1x32xf32>
    %118 = vector.extract_strided_slice %0 {offsets = [4, 0], sizes = [1, 32], strides = [1, 1]} : vector<16x32xf32> to vector<1x32xf32>
    %cst_44 = arith.constant dense<0.000000e+00> : vector<8xf32>
    %119 = vector.multi_reduction <add>, %116, %cst_44 [1] : vector<8x32xf32> to vector<8xf32>
    %120 = vector.shape_cast %119 : vector<8xf32> to vector<8x1xf32>
    %cst_45 = arith.constant 3.200000e+01 : f32
    %121 = vector.broadcast %cst_45 : f32 to vector<8x1xf32>
    %122 = arith.divf %120, %121 : vector<8x1xf32>
    %123 = vector.broadcast %122 : vector<8x1xf32> to vector<8x32xf32>
    %124 = arith.subf %116, %123 : vector<8x32xf32>
    %125 = vector.broadcast %122 : vector<8x1xf32> to vector<8x32xf32>
    %126 = arith.subf %116, %125 : vector<8x32xf32>
    %127 = arith.mulf %124, %126 : vector<8x32xf32>
    %cst_46 = arith.constant dense<0.000000e+00> : vector<8xf32>
    %128 = vector.multi_reduction <add>, %127, %cst_46 [1] : vector<8x32xf32> to vector<8xf32>
    %129 = vector.shape_cast %128 : vector<8xf32> to vector<8x1xf32>
    %cst_47 = arith.constant 3.200000e+01 : f32
    %130 = vector.broadcast %cst_47 : f32 to vector<8x1xf32>
    %131 = arith.divf %129, %130 : vector<8x1xf32>
    %132 = vector.broadcast %122 : vector<8x1xf32> to vector<8x32xf32>
    %133 = arith.subf %116, %132 : vector<8x32xf32>
    %cst_48 = arith.constant 9.99999974E-6 : f32
    %134 = vector.broadcast %cst_48 : f32 to vector<8x1xf32>
    %135 = arith.addf %131, %134 : vector<8x1xf32>
    %136 = math.rsqrt %135 : vector<8x1xf32>
    %137 = vector.broadcast %136 : vector<8x1xf32> to vector<8x32xf32>
    %138 = arith.mulf %133, %137 : vector<8x32xf32>
    %139 = vector.broadcast %117 : vector<1x32xf32> to vector<8x32xf32>
    %140 = arith.mulf %138, %139 : vector<8x32xf32>
    %141 = vector.broadcast %118 : vector<1x32xf32> to vector<8x32xf32>
    %142 = arith.addf %140, %141 : vector<8x32xf32>
    %c0_49 = arith.constant 0 : index
    %c384 = arith.constant 384 : index
    %143 = vector.load %arg2[%c0_49, %c384] : memref<32x896xf32, #tpu.memory_space<vmem>>, vector<32x32xf32>
    %cst_50 = arith.constant dense<0.000000e+00> : vector<8x32xf32>
    %144 = tpu.matmul %142, %143, %cst_50 {dimension_numbers = #tpu.dot_dimension_numbers<[1], [0], [0], [1], [0, 0, 1, 1], [], []>} : vector<8x32xf32>, vector<32x32xf32>, vector<8x32xf32> -> vector<8x32xf32>
    %145 = vector.extract_strided_slice %0 {offsets = [5, 0], sizes = [1, 32], strides = [1, 1]} : vector<16x32xf32> to vector<1x32xf32>
    %146 = vector.broadcast %145 : vector<1x32xf32> to vector<8x32xf32>
    %147 = arith.addf %144, %146 : vector<8x32xf32>
    %148 = arith.addf %147, %142 : vector<8x32xf32>
    %149 = vector.extract_strided_slice %0 {offsets = [6, 0], sizes = [1, 32], strides = [1, 1]} : vector<16x32xf32> to vector<1x32xf32>
    %150 = vector.extract_strided_slice %0 {offsets = [7, 0], sizes = [1, 32], strides = [1, 1]} : vector<16x32xf32> to vector<1x32xf32>
    %cst_51 = arith.constant dense<0.000000e+00> : vector<8xf32>
    %151 = vector.multi_reduction <add>, %148, %cst_51 [1] : vector<8x32xf32> to vector<8xf32>
    %152 = vector.shape_cast %151 : vector<8xf32> to vector<8x1xf32>
    %cst_52 = arith.constant 3.200000e+01 : f32
    %153 = vector.broadcast %cst_52 : f32 to vector<8x1xf32>
    %154 = arith.divf %152, %153 : vector<8x1xf32>
    %155 = vector.broadcast %154 : vector<8x1xf32> to vector<8x32xf32>
    %156 = arith.subf %148, %155 : vector<8x32xf32>
    %157 = vector.broadcast %154 : vector<8x1xf32> to vector<8x32xf32>
    %158 = arith.subf %148, %157 : vector<8x32xf32>
    %159 = arith.mulf %156, %158 : vector<8x32xf32>
    %cst_53 = arith.constant dense<0.000000e+00> : vector<8xf32>
    %160 = vector.multi_reduction <add>, %159, %cst_53 [1] : vector<8x32xf32> to vector<8xf32>
    %161 = vector.shape_cast %160 : vector<8xf32> to vector<8x1xf32>
    %cst_54 = arith.constant 3.200000e+01 : f32
    %162 = vector.broadcast %cst_54 : f32 to vector<8x1xf32>
    %163 = arith.divf %161, %162 : vector<8x1xf32>
    %164 = vector.broadcast %154 : vector<8x1xf32> to vector<8x32xf32>
    %165 = arith.subf %148, %164 : vector<8x32xf32>
    %cst_55 = arith.constant 9.99999974E-6 : f32
    %166 = vector.broadcast %cst_55 : f32 to vector<8x1xf32>
    %167 = arith.addf %163, %166 : vector<8x1xf32>
    %168 = math.rsqrt %167 : vector<8x1xf32>
    %169 = vector.broadcast %168 : vector<8x1xf32> to vector<8x32xf32>
    %170 = arith.mulf %165, %169 : vector<8x32xf32>
    %171 = vector.broadcast %149 : vector<1x32xf32> to vector<8x32xf32>
    %172 = arith.mulf %170, %171 : vector<8x32xf32>
    %173 = vector.broadcast %150 : vector<1x32xf32> to vector<8x32xf32>
    %174 = arith.addf %172, %173 : vector<8x32xf32>
    %c0_56 = arith.constant 0 : index
    %c512 = arith.constant 512 : index
    %175 = vector.load %arg2[%c0_56, %c512] : memref<32x896xf32, #tpu.memory_space<vmem>>, vector<32x16xf32>
    %cst_57 = arith.constant dense<0.000000e+00> : vector<8x16xf32>
    %176 = tpu.matmul %174, %175, %cst_57 {dimension_numbers = #tpu.dot_dimension_numbers<[1], [0], [0], [1], [0, 0, 1, 1], [], []>} : vector<8x32xf32>, vector<32x16xf32>, vector<8x16xf32> -> vector<8x16xf32>
    %177 = vector.extract_strided_slice %0 {offsets = [8, 0], sizes = [1, 16], strides = [1, 1]} : vector<16x32xf32> to vector<1x16xf32>
    %178 = vector.broadcast %177 : vector<1x16xf32> to vector<8x16xf32>
    %179 = arith.addf %176, %178 : vector<8x16xf32>
    %c0_58 = arith.constant 0 : index
    %c640 = arith.constant 640 : index
    %180 = vector.load %arg2[%c0_58, %c640] : memref<32x896xf32, #tpu.memory_space<vmem>>, vector<32x32xf32>
    %cst_59 = arith.constant dense<0.000000e+00> : vector<8x32xf32>
    %181 = tpu.matmul %174, %180, %cst_59 {dimension_numbers = #tpu.dot_dimension_numbers<[1], [0], [0], [1], [0, 0, 1, 1], [], []>} : vector<8x32xf32>, vector<32x32xf32>, vector<8x32xf32> -> vector<8x32xf32>
    %182 = vector.extract_strided_slice %0 {offsets = [9, 0], sizes = [1, 32], strides = [1, 1]} : vector<16x32xf32> to vector<1x32xf32>
    %183 = vector.broadcast %182 : vector<1x32xf32> to vector<8x32xf32>
    %184 = arith.addf %181, %183 : vector<8x32xf32>
    %185 = vector.extract_strided_slice %0 {offsets = [10, 0], sizes = [1, 32], strides = [1, 1]} : vector<16x32xf32> to vector<1x32xf32>
    %186 = vector.extract_strided_slice %0 {offsets = [11, 0], sizes = [1, 32], strides = [1, 1]} : vector<16x32xf32> to vector<1x32xf32>
    %cst_60 = arith.constant dense<0.000000e+00> : vector<32xf32>
    %187 = vector.multi_reduction <add>, %184, %cst_60 [0] : vector<8x32xf32> to vector<32xf32>
    %188 = vector.shape_cast %187 : vector<32xf32> to vector<1x32xf32>
    %cst_61 = arith.constant 8.000000e+00 : f32
    %189 = vector.broadcast %cst_61 : f32 to vector<1x32xf32>
    %190 = arith.divf %188, %189 : vector<1x32xf32>
    %191 = vector.broadcast %190 : vector<1x32xf32> to vector<8x32xf32>
    %192 = arith.subf %184, %191 : vector<8x32xf32>
    %193 = vector.broadcast %190 : vector<1x32xf32> to vector<8x32xf32>
    %194 = arith.subf %184, %193 : vector<8x32xf32>
    %195 = arith.mulf %192, %194 : vector<8x32xf32>
    %cst_62 = arith.constant dense<0.000000e+00> : vector<32xf32>
    %196 = vector.multi_reduction <add>, %195, %cst_62 [0] : vector<8x32xf32> to vector<32xf32>
    %197 = vector.shape_cast %196 : vector<32xf32> to vector<1x32xf32>
    %cst_63 = arith.constant 8.000000e+00 : f32
    %198 = vector.broadcast %cst_63 : f32 to vector<1x32xf32>
    %199 = arith.divf %197, %198 : vector<1x32xf32>
    %200 = vector.broadcast %190 : vector<1x32xf32> to vector<8x32xf32>
    %201 = arith.subf %184, %200 : vector<8x32xf32>
    %cst_64 = arith.constant 9.99999974E-6 : f32
    %202 = vector.broadcast %cst_64 : f32 to vector<1x32xf32>
    %203 = arith.addf %199, %202 : vector<1x32xf32>
    %204 = math.rsqrt %203 : vector<1x32xf32>
    %205 = vector.broadcast %204 : vector<1x32xf32> to vector<8x32xf32>
    %206 = arith.mulf %201, %205 : vector<8x32xf32>
    %207 = vector.broadcast %185 : vector<1x32xf32> to vector<8x32xf32>
    %208 = arith.mulf %206, %207 : vector<8x32xf32>
    %209 = vector.broadcast %186 : vector<1x32xf32> to vector<8x32xf32>
    %210 = arith.addf %208, %209 : vector<8x32xf32>
    %cst_65 = arith.constant 0.000000e+00 : f32
    %211 = vector.broadcast %cst_65 : f32 to vector<8x32xf32>
    %212 = arith.cmpf ogt, %210, %211 : vector<8x32xf32>
    %cst_66 = arith.constant 0.00999999977 : f32
    %213 = vector.broadcast %cst_66 : f32 to vector<8x32xf32>
    %214 = arith.mulf %213, %210 : vector<8x32xf32>
    %215 = arith.select %212, %210, %214 : vector<8x32xi1>, vector<8x32xf32>
    %c0_67 = arith.constant 0 : index
    %c768 = arith.constant 768 : index
    %216 = vector.load %arg2[%c0_67, %c768] : memref<32x896xf32, #tpu.memory_space<vmem>>, vector<32x32xf32>
    %cst_68 = arith.constant dense<0.000000e+00> : vector<8x32xf32>
    %217 = tpu.matmul %215, %216, %cst_68 {dimension_numbers = #tpu.dot_dimension_numbers<[1], [0], [0], [1], [0, 0, 1, 1], [], []>} : vector<8x32xf32>, vector<32x32xf32>, vector<8x32xf32> -> vector<8x32xf32>
    %218 = vector.extract_strided_slice %0 {offsets = [12, 0], sizes = [1, 32], strides = [1, 1]} : vector<16x32xf32> to vector<1x32xf32>
    %219 = vector.broadcast %218 : vector<1x32xf32> to vector<8x32xf32>
    %220 = arith.addf %217, %219 : vector<8x32xf32>
    %221 = tpu.concatenate %179, %220 in 1 : vector<8x16xf32>, vector<8x32xf32> -> vector<8x48xf32>
    %c0_69 = arith.constant 0 : index
    %c0_70 = arith.constant 0 : index
    %c0_71 = arith.constant 0 : index
    %222 = vector.load %arg4[%c0_69, %c0_70, %c0_71] : memref<1x8x48xf32, #tpu.memory_space<vmem>>, vector<1x8x48xf32>
    %223 = vector.shape_cast %222 : vector<1x8x48xf32> to vector<8x48xf32>
    %224 = vector.shape_cast %221 : vector<8x48xf32> to vector<1x8x48xf32>
    tpu.vector_store %arg4[%c0_69, %c0_70, %c0_71], %224 {strides = array<i32>} : memref<1x8x48xf32, #tpu.memory_space<vmem>>, vector<1x8x48xf32>,
    return
  }
  func.func @transform_0(%arg0: i32) -> (i32, i32, i32) {
    %c0_i32 = arith.constant 0 : i32
    %c0_i32_0 = arith.constant 0 : i32
    %c0_i32_1 = arith.constant 0 : i32
    return %arg0, %c0_i32, %c0_i32_0 : i32, i32, i32
  }
  func.func @transform_1(%arg0: i32) -> (i32, i32) {
    %c0_i32 = arith.constant 0 : i32
    %c0_i32_0 = arith.constant 0 : i32
    %c0_i32_1 = arith.constant 0 : i32
    return %c0_i32, %c0_i32_0 : i32, i32
  }
  func.func @transform_2(%arg0: i32) -> (i32, i32) {
    %c0_i32 = arith.constant 0 : i32
    %c0_i32_0 = arith.constant 0 : i32
    %c0_i32_1 = arith.constant 0 : i32
    return %c0_i32, %c0_i32_0 : i32, i32
  }
  func.func @transform_3(%arg0: i32) -> (i32, i32, i32) {
    %c0_i32 = arith.constant 0 : i32
    %c0_i32_0 = arith.constant 0 : i32
    %c0_i32_1 = arith.constant 0 : i32
    return %arg0, %c0_i32, %c0_i32_0 : i32, i32, i32
  }
}

</mosaic_0001>

<llo_original>
// kernel: encoder_connection_forward.1
$region0: #{encoder_connection_forward.1}
  #allocation0 [shape = 'u32[]', space=smem, size = 0x4, offset = 0x4, fixed_abs, tag = 'smem constant byte address 0x4 - core index']
  #allocation1 [shape = 'u32[72,128]{1,0:T(1,128)}', space=vmem, size = 0x9000, scoped, tag = 'internal scratch']
  #allocation2 [shape = 'f32[32,8]{1,0:T(8,128)}', space=vmem, size = 0x4000, scoped, tag = 'scratch operand']
  %s0 = inlined_call_operand.vmem [shape: f32[4,8,32], index: 0, kind: input, shape index: {}]
  %s1 = inlined_call_operand.hbm [shape: f32[32,896], index: 1, kind: input, shape index: {}]
  %s2 = inlined_call_operand.vmem [shape: f32[16,32], index: 2, kind: input, shape index: {}]
  %s3 = inlined_call_operand.vmem [shape: f32[4,8,48], index: 3, kind: output, shape index: {}]
  %s4 = sld [smem:[#allocation0]]
  $region49: #{encoder_connection_forward.1} parent=0
    _
  %s6 = ssub.s32 1, %s4
  %s7 = scalar_select 0, %s6, %s4
  $region1: #{encoder_connection_forward.1} parent=0
    #allocation3 [shape = 'u8[114688]{0}', space=vmem, size = 0x1c000, scoped, tag = 'input window, operand 1, single buffered']
    #allocation4 [shape = 's32[2]{0}', space=sflag, size = 0x8, scoped, tag = 'scoped memory for encoder_connection_forward.1']
    %8 = vsyncpa [#allocation4], 0
    loop: start=0, step=1, limit=6
    $region2: #{encoder_connection_forward.1} parent=1 // loop_pre_header
      _
    $region3: #{encoder_connection_forward.1} parent=1 // loop_header
      %s10 = sphi 0, %s14
      %p11 = scmp.ge.s32.totalorder %s10, 6
      %s20 = sphi 0, %s22
      %s23 = sphi 0, %s20
      %s24 = sphi 0, %s23
      %s40 = sphi 0, %s24
      %s44 = sphi 0, %s44
      %s46 = sphi 0, %s44
      %s47 = sphi 0, %s46
      %s61 = sphi 0, %s47
      %s65 = sphi 0, %s65
      %s67 = sphi 0, %s65
      %s68 = sphi 0, %s67
      %s82 = sphi 0, %s68
      %s88 = sphi 0, %s90
      %s91 = sphi 0, %s88
      %s92 = sphi 0, %s91
      %s108 = sphi 0, %s92
    $region4: #{encoder_connection_forward.1} parent=1 // loop_header_branch
      %13 = sbr.rel (%p11) target = $region8
    $region5: #{encoder_connection_forward.1} parent=1 // loop_body
      %s15 = ssub.s32 %s10, 1
      %s16 = ssub.s32 %s10, 2
      %s17 = sadd.s32 %s10, 1
      %s18 = ssub.s32 %s10, %s17
      %p19 = scmp.eq.s32.totalorder %s18, 0
      %s21 = sadd.s32 %s20, 1
      %s22 = scalar_select %p19, %s20, %s21
      %p25 = pneg %p19
      %p26 = scmp.eq.s32.totalorder %s10, 3
      %p27 = por %p25, %p26
      %p28 = scmp.ne.s32.totalorder %s20, %s23
      %p29 = scmp.eq.s32.totalorder %s10, 0
      %p30 = por %p28, %p29
      %p31 = scmp.ne.s32.totalorder %s20, %s23
      %p32 = scmp.eq.s32.totalorder %s15, 3
      %p33 = por %p31, %p32
      %p34 = scmp.ne.s32.totalorder %s23, %s24
      %p35 = scmp.eq.s32.totalorder %s15, 0
      %p36 = por %p34, %p35
      %p37 = scmp.ne.s32.totalorder %s23, %s24
      %p38 = scmp.eq.s32.totalorder %s16, 3
      %p39 = por %p37, %p38
      %p41 = scmp.ne.s32.totalorder %s24, %s40
      %p42 = scmp.eq.s32.totalorder %s16, 0
      %p43 = por %p41, %p42
      %s45 = sadd.s32 %s44, 1
      %p48 = scmp.eq.s32.totalorder %s10, 3
      %p49 = scmp.ne.s32.totalorder %s44, %s46
      %p50 = scmp.eq.s32.totalorder %s10, 0
      %p51 = por %p49, %p50
      %p52 = scmp.ne.s32.totalorder %s44, %s46
      %p53 = scmp.eq.s32.totalorder %s15, 3
      %p54 = por %p52, %p53
      %p55 = scmp.ne.s32.totalorder %s46, %s47
      %p56 = scmp.eq.s32.totalorder %s15, 0
      %p57 = por %p55, %p56
      %p58 = scmp.ne.s32.totalorder %s46, %s47
      %p59 = scmp.eq.s32.totalorder %s16, 3
      %p60 = por %p58, %p59
      %p62 = scmp.ne.s32.totalorder %s47, %s61
      %p63 = scmp.eq.s32.totalorder %s16, 0
      %p64 = por %p62, %p63
      %s66 = sadd.s32 %s65, 1
      %p69 = scmp.eq.s32.totalorder %s10, 3
      %p70 = scmp.ne.s32.totalorder %s65, %s67
      %p71 = scmp.eq.s32.totalorder %s10, 0
      %p72 = por %p70, %p71
      %p73 = scmp.ne.s32.totalorder %s65, %s67
      %p74 = scmp.eq.s32.totalorder %s15, 3
      %p75 = por %p73, %p74
      %p76 = scmp.ne.s32.totalorder %s67, %s68
      %p77 = scmp.eq.s32.totalorder %s15, 0
      %p78 = por %p76, %p77
      %p79 = scmp.ne.s32.totalorder %s67, %s68
      %p80 = scmp.eq.s32.totalorder %s16, 3
      %p81 = por %p79, %p80
      %p83 = scmp.ne.s32.totalorder %s68, %s82
      %p84 = scmp.eq.s32.totalorder %s16, 0
      %p85 = por %p83, %p84
      %s86 = ssub.s32 %s10, %s17
      %p87 = scmp.eq.s32.totalorder %s86, 0
      %s89 = sadd.s32 %s88, 1
      %s90 = scalar_select %p87, %s88, %s89
      %p93 = pneg %p87
      %p94 = scmp.eq.s32.totalorder %s10, 3
      %p95 = por %p93, %p94
      %p96 = scmp.ne.s32.totalorder %s88, %s91
      %p97 = scmp.eq.s32.totalorder %s10, 0
      %p98 = por %p96, %p97
      %p99 = scmp.ne.s32.totalorder %s88, %s91
      %p100 = scmp.eq.s32.totalorder %s15, 3
      %p101 = por %p99, %p100
      %p102 = scmp.ne.s32.totalorder %s91, %s92
      %p103 = scmp.eq.s32.totalorder %s15, 0
      %p104 = por %p102, %p103
      %p105 = scmp.ne.s32.totalorder %s91, %s92
      %p106 = scmp.eq.s32.totalorder %s16, 3
      %p107 = por %p105, %p106
      %p109 = scmp.ne.s32.totalorder %s92, %s108
      %p110 = scmp.eq.s32.totalorder %s16, 0
      %p111 = por %p109, %p110
      %p112 = scmp.le.s32.totalorder 1, %s10
      %p113 = scmp.lt.s32.totalorder %s10, 5
      %p114 = pnand %p112, %p113
      %p115 = pneg %p114
      // Predicated region
      $region9: #{encoder_connection_forward.1} parent=5 // pred_check
        _
      $region10: #{encoder_connection_forward.1} parent=5 // pred_check_branch
        %117 = sbr.rel (%p114) target = $region12
      $region11: #{encoder_connection_forward.1} parent=5 // pred_region
        %s118 = ssub.s32 %s10, 1
        // Predicated region
        $region13: #{encoder_connection_forward.1} parent=11 // pred_check
          %p119 = pneg %p57
        $region14: #{encoder_connection_forward.1} parent=11 // pred_check_branch
          %121 = sbr.rel (%p119) target = $region16
        $region15: #{encoder_connection_forward.1} parent=11 // pred_region
          %123 = vsyncadd [#allocation4], 0
          %s124 = sshll.u32 %s1, 4
          %s125 = int_to_ptr.hbm [resolvable:$true] %s124
          %s126 = sshll.u32 [#allocation3], 4
          %s127 = int_to_ptr.vmem [resolvable:$true] %s126
          %132 = dma.hbm_to_vmem [thread:$0]  %s125, 3584, %s127, [#allocation4], 896, 896, 56
        $region16: #{encoder_connection_forward.1} parent=11 // pred_fallthru
          _
        // Predicated region
        $region17: #{encoder_connection_forward.1} parent=11 // pred_check
          %p133 = pneg %p78
        $region18: #{encoder_connection_forward.1} parent=11 // pred_check_branch
          %135 = sbr.rel (%p133) target = $region20
        $region19: #{encoder_connection_forward.1} parent=11 // pred_region
          _
        $region20: #{encoder_connection_forward.1} parent=11 // pred_fallthru
          _
      $region12: #{encoder_connection_forward.1} parent=5 // pred_fallthru
        _
      %p136 = scmp.lt.s32.totalorder %s10, 4
      // Predicated region
      $region21: #{encoder_connection_forward.1} parent=5 // pred_check
        %p137 = pneg %p136
      $region22: #{encoder_connection_forward.1} parent=5 // pred_check_branch
        %139 = sbr.rel (%p137) target = $region24
      $region23: #{encoder_connection_forward.1} parent=5 // pred_region
        // Predicated region
        $region25: #{encoder_connection_forward.1} parent=23 // pred_check
          %p140 = pneg %p30
        $region26: #{encoder_connection_forward.1} parent=23 // pred_check_branch
          %142 = sbr.rel (%p140) target = $region28
        $region27: #{encoder_connection_forward.1} parent=23 // pred_region
          %p143 = scmp.lt.s32.totalorder %s10, 3
          %s144 = scalar_select %p143, %s10, 3
          %s145 = smul.addr %s144, 8
          %s146 = scalar_lea.vmem %s0, %s145
        $region28: #{encoder_connection_forward.1} parent=23 // pred_fallthru
          _
      $region24: #{encoder_connection_forward.1} parent=5 // pred_fallthru
        _
      %p147 = scmp.le.s32.totalorder 1, %s10
      %p148 = scmp.lt.s32.totalorder %s10, 5
      %p149 = pnand %p147, %p148
      %p150 = pneg %p149
      // Predicated region
      $region29: #{encoder_connection_forward.1} parent=5 // pred_check
        _
      $region30: #{encoder_connection_forward.1} parent=5 // pred_check_branch
        %152 = sbr.rel (%p149) target = $region32
      $region31: #{encoder_connection_forward.1} parent=5 // pred_region
        %s153 = ssub.s32 %s10, 1
        // Predicated region
        $region33: #{encoder_connection_forward.1} parent=31 // pred_check
          %p154 = pneg %p57
        $region34: #{encoder_connection_forward.1} parent=31 // pred_check_branch
          %156 = sbr.rel (%p154) target = $region36
        $region35: #{encoder_connection_forward.1} parent=31 // pred_region
          %158 = dma.done [#allocation4], 3584
        $region36: #{encoder_connection_forward.1} parent=31 // pred_fallthru
          _
        %p159 = scmp.lt.s32.totalorder %s15, 3
        %s160 = scalar_select %p159, %s15, 3
        %s161 = smul.addr %s160, 8
        %s162 = scalar_lea.vmem %s0, %s161
        %p163 = pneg %p36
        %p164 = pneg %p33
        %p165 = pneg %p57
        %p166 = pneg %p54
        %p167 = pneg %p78
        %p168 = pneg %p75
        %p169 = pneg %p104
        %p170 = pneg %p101
        %p171 = scmp.lt.s32.totalorder %s15, 3
        %s172 = scalar_select %p171, %s15, 3
        %s173 = smul.addr %s172, 8
        %s174 = scalar_lea.vmem %s3, %s173
        %p175 = scmp.lt.s32.totalorder %s15, 3
        %s176 = scalar_select %p175, %s15, 3
        %s177 = smul.addr %s176, 8
        %s178 = scalar_lea.vmem %s0, %s177
        %p179 = scmp.lt.s32.totalorder %s15, 3
        %s180 = scalar_select %p179, %s15, 3
        %s181 = smul.addr %s180, 8
        %s182 = scalar_lea.vmem %s3, %s181
        %v183 = vld [vmem:[%s2] sm:$0xff]
        %v184 = vld [vmem:[%s2 + $0x8] sm:$0xff]
        %v185 = vld [vmem:[%s178] sm:$0xff]
        %v186 = vld [vmem:[#allocation3] sm:$0xff]
        %v187 = vld [vmem:[#allocation3 + $0x38] sm:$0xff]
        %v188 = vld [vmem:[#allocation3 + $0x70] sm:$0xff]
        %v189 = vld [vmem:[#allocation3 + $0xa8] sm:$0xff]
        %v190 = vperm.slane %v183, 0
        %vm191 = vcmask 261120
        %v193 = vsel %vm191, %v185, 0
        %195 = vmatpush.msra.mxu0 0.0
        %196 = vmatpush.msra.mxu0 0.0
        %197 = vmatpush.msra.mxu0 0.0
        %198 = vmatpush.msra.mxu0 0.0
        %199 = vmatpush.msra.mxu0 0.0
        %200 = vmatpush.msra.mxu0 0.0
        %201 = vmatpush.msra.mxu0 0.0
        %202 = vmatpush.msra.mxu0 0.0
        %203 = vmatpush.msra.mxu0 0.0
        %204 = vmatpush.msra.mxu0 0.0
        %205 = vmatpush.msra.mxu0 0.0
        %206 = vmatpush.msra.mxu0 0.0
        %207 = vmatpush.msra.mxu0 %v189
        %208 = vmatpush.msra.mxu0 %v188
        %209 = vmatpush.msra.mxu0 %v187
        %210 = vmatpush.msra.mxu0 %v186
        %211 = vmatmul.f32.gmra.mxu0 %v193
        %v212 = vpop.f32.mrf.mxu0
        %v213 = vadd.f32 %v190, %v212
        %214 = vdwg.mxu0
        %v215 = vsel %vm191, %v213, 0.0
        %v216 = vrot.slane %v215, 4
        %v217 = vadd.f32 %v215, %v216
        %v218 = vrot.slane %v217, 2
        %v219 = vadd.f32 %v217, %v218
        %v220 = vrot.slane %v219, 1
        %v221 = vadd.f32 %v219, %v220
        %v222 = vrcp.pop 8.0
        %v223 = vmul.f32 8.0, %v222
        %v224 = vsub.f32 1.0, %v223
        %v225 = vmul.f32 %v222, %v224
        %v226 = vadd.f32 %v222, %v225
        %vm227 = vweird.f32 %v222
        %v228 = vsel %vm227, %v222, %v226
        %v229 = vmul.f32 %v221, %v228
        %v230 = vsub.f32 %v213, %v229
        %v231 = vmul.f32 %v230, %v230
        %v232 = vsel %vm191, %v231, 0.0
        %v233 = vrot.slane %v232, 4
        %v234 = vadd.f32 %v232, %v233
        %v235 = vrot.slane %v234, 2
        %v236 = vadd.f32 %v234, %v235
        %v237 = vrot.slane %v236, 1
        %v238 = vadd.f32 %v236, %v237
        %v239 = vmul.f32 %v238, %v228
        %v240 = vadd.f32 %v239, 1e-05
        %v241 = vrsqrt.pop %v240
        %v242 = vmul.f32 %v241, %v240
        %v243 = vmul.f32 %v242, %v241
        %v244 = vmul.f32 0.5, %v243
        %v245 = vsub.f32 1.5, %v244
        %v246 = vmul.f32 %v241, %v245
        %vm247 = vweird.f32 %v240
        %vm248 = vweird.f32 %v241
        %vm249 = vmor %vm247, %vm248
        %v250 = vsel %vm249, %v241, %v246
        %v251 = vmul.f32 %v230, %v250
        %v252 = vperm.slane %v183, 1
        %v253 = vmul.f32 %v251, %v252
        %v254 = vperm.slane %v183, 2
        %v255 = vadd.f32 %v253, %v254
        %vm256 = vcmp.gt.f32.partialorder %v255, 0.0
        %v257 = vmul.f32 %v255, 0.01
        %v258 = vsel %vm256, %v255, %v257
        %v259 = vld [vmem:[#allocation3 + $0x8] sm:$0xff]
        %v260 = vld [vmem:[#allocation3 + $0x40] sm:$0xff]
        %v261 = vld [vmem:[#allocation3 + $0x78] sm:$0xff]
        %v262 = vld [vmem:[#allocation3 + $0xb0] sm:$0xff]
        %v264 = vsel %vm191, %v258, 0
        %266 = vmatpush.msra.mxu0 0.0
        %267 = vmatpush.msra.mxu0 0.0
        %268 = vmatpush.msra.mxu0 0.0
        %269 = vmatpush.msra.mxu0 0.0
        %270 = vmatpush.msra.mxu0 0.0
        %271 = vmatpush.msra.mxu0 0.0
        %272 = vmatpush.msra.mxu0 0.0
        %273 = vmatpush.msra.mxu0 0.0
        %274 = vmatpush.msra.mxu0 0.0
        %275 = vmatpush.msra.mxu0 0.0
        %276 = vmatpush.msra.mxu0 0.0
        %277 = vmatpush.msra.mxu0 0.0
        %278 = vmatpush.msra.mxu0 %v262
        %279 = vmatpush.msra.mxu0 %v261
        %280 = vmatpush.msra.mxu0 %v260
        %281 = vmatpush.msra.mxu0 %v259
        %282 = vmatmul.f32.gmra.mxu0 %v264
        %v283 = vpop.f32.mrf.mxu0
        %v284 = vadd.f32 0.0, %v283
        %285 = vdwg.mxu0
        %v286 = vld [vmem:[#allocation3 + $0x10] sm:$0xff]
        %v287 = vld [vmem:[#allocation3 + $0x48] sm:$0xff]
        %v288 = vld [vmem:[#allocation3 + $0x80] sm:$0xff]
        %v289 = vld [vmem:[#allocation3 + $0xb8] sm:$0xff]
        %290 = vmatpush.msra.mxu0 0.0
        %291 = vmatpush.msra.mxu0 0.0
        %292 = vmatpush.msra.mxu0 0.0
        %293 = vmatpush.msra.mxu0 0.0
        %294 = vmatpush.msra.mxu0 0.0
        %295 = vmatpush.msra.mxu0 0.0
        %296 = vmatpush.msra.mxu0 0.0
        %297 = vmatpush.msra.mxu0 0.0
        %298 = vmatpush.msra.mxu0 0.0
        %299 = vmatpush.msra.mxu0 0.0
        %300 = vmatpush.msra.mxu0 0.0
        %301 = vmatpush.msra.mxu0 0.0
        %302 = vmatpush.msra.mxu0 %v289
        %303 = vmatpush.msra.mxu0 %v288
        %304 = vmatpush.msra.mxu0 %v287
        %305 = vmatpush.msra.mxu0 %v286
        %306 = vmatmul.f32.gmra.mxu0 %v264
        %v307 = vpop.f32.mrf.mxu0
        %v308 = vadd.f32 0.0, %v307
        %309 = vdwg.mxu0
        %v311 = vsel %vm191, %v284, 0
        %313 = vmatpush.xpose.msra.mxu0 0.0
        %314 = vmatpush.xpose.msra.mxu0 0.0
        %315 = vmatpush.xpose.msra.mxu0 0.0
        %316 = vmatpush.xpose.msra.mxu0 0.0
        %317 = vmatpush.xpose.msra.mxu0 0.0
        %318 = vmatpush.xpose.msra.mxu0 0.0
        %319 = vmatpush.xpose.msra.mxu0 0.0
        %320 = vmatpush.xpose.msra.mxu0 0.0
        %321 = vmatpush.xpose.msra.mxu0 0.0
        %322 = vmatpush.xpose.msra.mxu0 0.0
        %323 = vmatpush.xpose.msra.mxu0 0.0
        %324 = vmatpush.xpose.msra.mxu0 0.0
        %325 = vmatpush.xpose.msra.mxu0 0.0
        %326 = vmatpush.xpose.msra.mxu0 0.0
        %327 = vmatpush.xpose.msra.mxu0 0.0
        %328 = vmatpush.xpose.msra.mxu0 %v264
        %329 = vmatmul.f32.gmra.mxu0 %v311
        %v330 = vpop.f32.mrf.mxu0
        %v331 = vadd.f32 0.0, %v330
        %332 = vdwg.mxu0
        %v333 = vmul.f32 %v331, 0.35355338
        %vm334 = vcmask 64512
        %v335 = vsel %vm334, %v333, -inf
        %336 = vmax.xlane.f32.xlu0 %v335
        %v337 = vpop.xlane.xlu0 %336
        %v338 = vsub.f32 %v333, %v337
        %v339 = vmul.f32 %v338, 1.442695
        %v340 = vpow.pop %v339
        %v341 = vsel %vm334, %v340, 0.0
        %342 = vadd.xlane.f32.xlu0 %v341
        %v343 = vpop.xlane.xlu0 %342
        %v344 = vrcp.pop %v343
        %v345 = vmul.f32 %v340, %v344
        %v347 = vsel %vm334, %v345, 0
        %349 = vmatpush.msra.mxu0 0.0
        %350 = vmatpush.msra.mxu0 0.0
        %351 = vmatpush.msra.mxu0 0.0
        %352 = vmatpush.msra.mxu0 0.0
        %353 = vmatpush.msra.mxu0 0.0
        %354 = vmatpush.msra.mxu0 0.0
        %355 = vmatpush.msra.mxu0 0.0
        %356 = vmatpush.msra.mxu0 0.0
        %357 = vmatpush.msra.mxu0 0.0
        %358 = vmatpush.msra.mxu0 0.0
        %359 = vmatpush.msra.mxu0 0.0
        %360 = vmatpush.msra.mxu0 0.0
        %361 = vmatpush.msra.mxu0 0.0
        %362 = vmatpush.msra.mxu0 0.0
        %363 = vmatpush.msra.mxu0 0.0
        %364 = vmatpush.msra.mxu0 %v308
        %365 = vmatmul.f32.gmra.mxu0 %v347
        %v366 = vpop.f32.mrf.mxu0
        %v367 = vadd.f32 0.0, %v366
        %368 = vdwg.mxu0
        %369 = vrot.lane.b32.xlu0 %v284, 96
        %v370 = vpop.permute.xlu0 %369
        %v371 = vsel %vm191, %v370, 0
        %373 = vmatpush.xpose.msra.mxu0 0.0
        %374 = vmatpush.xpose.msra.mxu0 0.0
        %375 = vmatpush.xpose.msra.mxu0 0.0
        %376 = vmatpush.xpose.msra.mxu0 0.0
        %377 = vmatpush.xpose.msra.mxu0 0.0
        %378 = vmatpush.xpose.msra.mxu0 0.0
        %379 = vmatpush.xpose.msra.mxu0 0.0
        %380 = vmatpush.xpose.msra.mxu0 0.0
        %381 = vmatpush.xpose.msra.mxu0 0.0
        %382 = vmatpush.xpose.msra.mxu0 0.0
        %383 = vmatpush.xpose.msra.mxu0 0.0
        %384 = vmatpush.xpose.msra.mxu0 0.0
        %385 = vmatpush.xpose.msra.mxu0 0.0
        %386 = vmatpush.xpose.msra.mxu0 0.0
        %387 = vmatpush.xpose.msra.mxu0 0.0
        %388 = vmatpush.xpose.msra.mxu0 %v264
        %389 = vmatmul.f32.gmra.mxu0 %v371
        %v390 = vpop.f32.mrf.mxu0
        %v391 = vadd.f32 0.0, %v390
        %392 = vdwg.mxu0
        %v393 = vmul.f32 %v391, 0.35355338
        %v394 = vsel %vm334, %v393, -inf
        %395 = vmax.xlane.f32.xlu0 %v394
        %v396 = vpop.xlane.xlu0 %395
        %v397 = vsub.f32 %v393, %v396
        %v398 = vmul.f32 %v397, 1.442695
        %v399 = vpow.pop %v398
        %v400 = vsel %vm334, %v399, 0.0
        %401 = vadd.xlane.f32.xlu0 %v400
        %v402 = vpop.xlane.xlu0 %401
        %v403 = vrcp.pop %v402
        %v404 = vmul.f32 %v399, %v403
        %406 = vrot.lane.b32.xlu0 %v308, 120
        %v407 = vpop.permute.xlu0 %406
        %v410 = vsel %vm334, %v404, 0
        %412 = vmatpush.msra.mxu0 0.0
        %413 = vmatpush.msra.mxu0 0.0
        %414 = vmatpush.msra.mxu0 0.0
        %415 = vmatpush.msra.mxu0 0.0
        %416 = vmatpush.msra.mxu0 0.0
        %417 = vmatpush.msra.mxu0 0.0
        %418 = vmatpush.msra.mxu0 0.0
        %419 = vmatpush.msra.mxu0 0.0
        %420 = vmatpush.msra.mxu0 0.0
        %421 = vmatpush.msra.mxu0 0.0
        %422 = vmatpush.msra.mxu0 0.0
        %423 = vmatpush.msra.mxu0 0.0
        %424 = vmatpush.msra.mxu0 0.0
        %425 = vmatpush.msra.mxu0 0.0
        %426 = vmatpush.msra.mxu0 0.0
        %427 = vmatpush.msra.mxu0 %v407
        %428 = vmatmul.f32.gmra.mxu0 %v410
        %v429 = vpop.f32.mrf.mxu0
        %v430 = vadd.f32 0.0, %v429
        %431 = vdwg.mxu0
        %432 = vrot.lane.b32.xlu0 %v284, 64
        %v433 = vpop.permute.xlu0 %432
        %v434 = vsel %vm191, %v433, 0
        %436 = vmatpush.xpose.msra.mxu0 0.0
        %437 = vmatpush.xpose.msra.mxu0 0.0
        %438 = vmatpush.xpose.msra.mxu0 0.0
        %439 = vmatpush.xpose.msra.mxu0 0.0
        %440 = vmatpush.xpose.msra.mxu0 0.0
        %441 = vmatpush.xpose.msra.mxu0 0.0
        %442 = vmatpush.xpose.msra.mxu0 0.0
        %443 = vmatpush.xpose.msra.mxu0 0.0
        %444 = vmatpush.xpose.msra.mxu0 0.0
        %445 = vmatpush.xpose.msra.mxu0 0.0
        %446 = vmatpush.xpose.msra.mxu0 0.0
        %447 = vmatpush.xpose.msra.mxu0 0.0
        %448 = vmatpush.xpose.msra.mxu0 0.0
        %449 = vmatpush.xpose.msra.mxu0 0.0
        %450 = vmatpush.xpose.msra.mxu0 0.0
        %451 = vmatpush.xpose.msra.mxu0 %v264
        %452 = vmatmul.f32.gmra.mxu0 %v434
        %v453 = vpop.f32.mrf.mxu0
        %v454 = vadd.f32 0.0, %v453
        %455 = vdwg.mxu0
        %v456 = vmul.f32 %v454, 0.35355338
        %v457 = vsel %vm334, %v456, -inf
        %458 = vmax.xlane.f32.xlu0 %v457
        %v459 = vpop.xlane.xlu0 %458
        %v460 = vsub.f32 %v456, %v459
        %v461 = vmul.f32 %v460, 1.442695
        %v462 = vpow.pop %v461
        %v463 = vsel %vm334, %v462, 0.0
        %464 = vadd.xlane.f32.xlu0 %v463
        %v465 = vpop.xlane.xlu0 %464
        %v466 = vrcp.pop %v465
        %v467 = vmul.f32 %v462, %v466
        %468 = vrot.lane.b32.xlu0 %v308, 112
        %v469 = vpop.permute.xlu0 %468
        %v472 = vsel %vm334, %v467, 0
        %474 = vmatpush.msra.mxu0 0.0
        %475 = vmatpush.msra.mxu0 0.0
        %476 = vmatpush.msra.mxu0 0.0
        %477 = vmatpush.msra.mxu0 0.0
        %478 = vmatpush.msra.mxu0 0.0
        %479 = vmatpush.msra.mxu0 0.0
        %480 = vmatpush.msra.mxu0 0.0
        %481 = vmatpush.msra.mxu0 0.0
        %482 = vmatpush.msra.mxu0 0.0
        %483 = vmatpush.msra.mxu0 0.0
        %484 = vmatpush.msra.mxu0 0.0
        %485 = vmatpush.msra.mxu0 0.0
        %486 = vmatpush.msra.mxu0 0.0
        %487 = vmatpush.msra.mxu0 0.0
        %488 = vmatpush.msra.mxu0 0.0
        %489 = vmatpush.msra.mxu0 %v469
        %490 = vmatmul.f32.gmra.mxu0 %v472
        %v491 = vpop.f32.mrf.mxu0
        %v492 = vadd.f32 0.0, %v491
        %493 = vdwg.mxu0
        %494 = vrot.lane.b32.xlu0 %v284, 32
        %v495 = vpop.permute.xlu0 %494
        %v496 = vsel %vm191, %v495, 0
        %498 = vmatpush.xpose.msra.mxu0 0.0
        %499 = vmatpush.xpose.msra.mxu0 0.0
        %500 = vmatpush.xpose.msra.mxu0 0.0
        %501 = vmatpush.xpose.msra.mxu0 0.0
        %502 = vmatpush.xpose.msra.mxu0 0.0
        %503 = vmatpush.xpose.msra.mxu0 0.0
        %504 = vmatpush.xpose.msra.mxu0 0.0
        %505 = vmatpush.xpose.msra.mxu0 0.0
        %506 = vmatpush.xpose.msra.mxu0 0.0
        %507 = vmatpush.xpose.msra.mxu0 0.0
        %508 = vmatpush.xpose.msra.mxu0 0.0
        %509 = vmatpush.xpose.msra.mxu0 0.0
        %510 = vmatpush.xpose.msra.mxu0 0.0
        %511 = vmatpush.xpose.msra.mxu0 0.0
        %512 = vmatpush.xpose.msra.mxu0 0.0
        %513 = vmatpush.xpose.msra.mxu0 %v264
        %514 = vmatmul.f32.gmra.mxu0 %v496
        %v515 = vpop.f32.mrf.mxu0
        %v516 = vadd.f32 0.0, %v515
        %517 = vdwg.mxu0
        %v518 = vmul.f32 %v516, 0.35355338
        %v519 = vsel %vm334, %v518, -inf
        %520 = vmax.xlane.f32.xlu0 %v519
        %v521 = vpop.xlane.xlu0 %520
        %v522 = vsub.f32 %v518, %v521
        %v523 = vmul.f32 %v522, 1.442695
        %v524 = vpow.pop %v523
        %v525 = vsel %vm334, %v524, 0.0
        %526 = vadd.xlane.f32.xlu0 %v525
        %v527 = vpop.xlane.xlu0 %526
        %v528 = vrcp.pop %v527
        %v529 = vmul.f32 %v524, %v528
        %530 = vrot.lane.b32.xlu0 %v308, 104
        %v531 = vpop.permute.xlu0 %530
        %v534 = vsel %vm334, %v529, 0
        %536 = vmatpush.msra.mxu0 0.0
        %537 = vmatpush.msra.mxu0 0.0
        %538 = vmatpush.msra.mxu0 0.0
        %539 = vmatpush.msra.mxu0 0.0
        %540 = vmatpush.msra.mxu0 0.0
        %541 = vmatpush.msra.mxu0 0.0
        %542 = vmatpush.msra.mxu0 0.0
        %543 = vmatpush.msra.mxu0 0.0
        %544 = vmatpush.msra.mxu0 0.0
        %545 = vmatpush.msra.mxu0 0.0
        %546 = vmatpush.msra.mxu0 0.0
        %547 = vmatpush.msra.mxu0 0.0
        %548 = vmatpush.msra.mxu0 0.0
        %549 = vmatpush.msra.mxu0 0.0
        %550 = vmatpush.msra.mxu0 0.0
        %551 = vmatpush.msra.mxu0 %v531
        %552 = vmatmul.f32.gmra.mxu0 %v534
        %v553 = vpop.f32.mrf.mxu0
        %v554 = vadd.f32 0.0, %v553
        %555 = vdwg.mxu0
        %557 = vrot.lane.b32.xlu0 %v430, 8
        %v558 = vpop.permute.xlu0 %557
        %561 = vrot.lane.b32.xlu0 %v492, 16
        %v562 = vpop.permute.xlu0 %561
        %565 = vrot.lane.b32.xlu0 %v554, 24
        %v566 = vpop.permute.xlu0 %565
        %v568 = vsel %vm334, %v367, %v558
        %vm569 = vcmask 130048
        %v570 = vsel %vm569, %v568, %v562
        %vm571 = vcmask 195584
        %v572 = vsel %vm571, %v570, %v566
        %573 = vxpose.xlu0.b32.start [1/16] %v572, 128
        %574 = vxpose.xlu0.b32.cont [2/16] 0.0, 128
        %575 = vxpose.xlu0.b32.cont [3/16] 0.0, 128
        %576 = vxpose.xlu0.b32.cont [4/16] 0.0, 128
        %577 = vxpose.xlu0.b32.cont [5/16] 0.0, 128
        %578 = vxpose.xlu0.b32.cont [6/16] 0.0, 128
        %579 = vxpose.xlu0.b32.cont [7/16] 0.0, 128
        %580 = vxpose.xlu0.b32.cont [8/16] 0.0, 128
        %581 = vxpose.xlu0.b32.cont [9/16] 0.0, 128
        %582 = vxpose.xlu0.b32.cont [10/16] 0.0, 128
        %583 = vxpose.xlu0.b32.cont [11/16] 0.0, 128
        %584 = vxpose.xlu0.b32.cont [12/16] 0.0, 128
        %585 = vxpose.xlu0.b32.cont [13/16] 0.0, 128
        %586 = vxpose.xlu0.b32.cont [14/16] 0.0, 128
        %587 = vxpose.xlu0.b32.cont [15/16] 0.0, 128
        %588 = vxpose.xlu0.b32.end [16/16] 0.0, 128
        %v589 = vpop.trf.xlu0
        %v590 = vpop.trf.xlu0
        %v591 = vpop.trf.xlu0
        %v592 = vpop.trf.xlu0
        %v593 = vpop.trf.xlu0
        %v594 = vpop.trf.xlu0
        %v595 = vpop.trf.xlu0
        %v596 = vpop.trf.xlu0
        %v597 = vpop.trf.xlu0
        %v598 = vpop.trf.xlu0
        %v599 = vpop.trf.xlu0
        %v600 = vpop.trf.xlu0
        %v601 = vpop.trf.xlu0
        %v602 = vpop.trf.xlu0
        %v603 = vpop.trf.xlu0
        %v604 = vpop.trf.xlu0
        %605 = vst.msk [vmem:[#allocation2] sm:$0xff] %vm334, %v589
        %606 = vst.msk [vmem:[#allocation2 + $0x8] sm:$0xff] %vm334, %v590
        %607 = vst.msk [vmem:[#allocation2 + $0x10] sm:$0xff] %vm334, %v591
        %608 = vst.msk [vmem:[#allocation2 + $0x18] sm:$0xff] %vm334, %v592
        %v609 = vld [vmem:[#allocation2] ss:$4 sm:$0xff]
        %s610 = scalar_lea.vmem [#allocation2], 1
        %v611 = vld [vmem:[%s610] ss:$4 sm:$0xff]
        %s612 = scalar_lea.vmem [#allocation2], 2
        %v613 = vld [vmem:[%s612] ss:$4 sm:$0xff]
        %s614 = scalar_lea.vmem [#allocation2], 3
        %v615 = vld [vmem:[%s614] ss:$4 sm:$0xff]
        %617 = vrot.lane.b32.xlu0 %v611, 8
        %v618 = vpop.permute.xlu0 %617
        %621 = vrot.lane.b32.xlu0 %v613, 16
        %v622 = vpop.permute.xlu0 %621
        %625 = vrot.lane.b32.xlu0 %v615, 24
        %v626 = vpop.permute.xlu0 %625
        %v628 = vsel %vm334, %v609, %v618
        %v629 = vsel %vm569, %v628, %v622
        %v630 = vsel %vm571, %v629, %v626
        %v631 = vadd.f32 %v630, %v258
        %v632 = vsel %vm191, %v631, 0.0
        %633 = vadd.xlane.f32.xlu0 %v632
        %v634 = vpop.xlane.xlu0 %633
        %v635 = vrcp.pop 32.0
        %v636 = vmul.f32 32.0, %v635
        %v637 = vsub.f32 1.0, %v636
        %v638 = vmul.f32 %v635, %v637
        %v639 = vadd.f32 %v635, %v638
        %vm640 = vweird.f32 %v635
        %v641 = vsel %vm640, %v635, %v639
        %v642 = vmul.f32 %v634, %v641
        %v643 = vsub.f32 %v631, %v642
        %v644 = vmul.f32 %v643, %v643
        %v645 = vsel %vm191, %v644, 0.0
        %646 = vadd.xlane.f32.xlu0 %v645
        %v647 = vpop.xlane.xlu0 %646
        %v648 = vmul.f32 %v647, %v641
        %v649 = vadd.f32 %v648, 1e-05
        %v650 = vrsqrt.pop %v649
        %v651 = vmul.f32 %v650, %v649
        %v652 = vmul.f32 %v651, %v650
        %v653 = vmul.f32 0.5, %v652
        %v654 = vsub.f32 1.5, %v653
        %v655 = vmul.f32 %v650, %v654
        %vm656 = vweird.f32 %v649
        %vm657 = vweird.f32 %v650
        %vm658 = vmor %vm656, %vm657
        %v659 = vsel %vm658, %v650, %v655
        %v660 = vmul.f32 %v643, %v659
        %v661 = vperm.slane %v183, 3
        %v662 = vmul.f32 %v660, %v661
        %v663 = vperm.slane %v183, 4
        %v664 = vadd.f32 %v662, %v663
        %v665 = vld [vmem:[#allocation3 + $0x18] sm:$0xff]
        %v666 = vld [vmem:[#allocation3 + $0x50] sm:$0xff]
        %v667 = vld [vmem:[#allocation3 + $0x88] sm:$0xff]
        %v668 = vld [vmem:[#allocation3 + $0xc0] sm:$0xff]
        %v669 = vperm.slane %v183, 5
        %v671 = vsel %vm191, %v664, 0
        %673 = vmatpush.msra.mxu0 0.0
        %674 = vmatpush.msra.mxu0 0.0
        %675 = vmatpush.msra.mxu0 0.0
        %676 = vmatpush.msra.mxu0 0.0
        %677 = vmatpush.msra.mxu0 0.0
        %678 = vmatpush.msra.mxu0 0.0
        %679 = vmatpush.msra.mxu0 0.0
        %680 = vmatpush.msra.mxu0 0.0
        %681 = vmatpush.msra.mxu0 0.0
        %682 = vmatpush.msra.mxu0 0.0
        %683 = vmatpush.msra.mxu0 0.0
        %684 = vmatpush.msra.mxu0 0.0
        %685 = vmatpush.msra.mxu0 %v668
        %686 = vmatpush.msra.mxu0 %v667
        %687 = vmatpush.msra.mxu0 %v666
        %688 = vmatpush.msra.mxu0 %v665
        %689 = vmatmul.f32.gmra.mxu0 %v671
        %v690 = vpop.f32.mrf.mxu0
        %v691 = vadd.f32 %v669, %v690
        %692 = vdwg.mxu0
        %v693 = vadd.f32 %v691, %v664
        %v694 = vsel %vm191, %v693, 0.0
        %695 = vadd.xlane.f32.xlu0 %v694
        %v696 = vpop.xlane.xlu0 %695
        %v697 = vmul.f32 %v696, %v641
        %v698 = vsub.f32 %v693, %v697
        %v699 = vmul.f32 %v698, %v698
        %v700 = vsel %vm191, %v699, 0.0
        %701 = vadd.xlane.f32.xlu0 %v700
        %v702 = vpop.xlane.xlu0 %701
        %v703 = vmul.f32 %v702, %v641
        %v704 = vadd.f32 %v703, 1e-05
        %v705 = vrsqrt.pop %v704
        %v706 = vmul.f32 %v705, %v704
        %v707 = vmul.f32 %v706, %v705
        %v708 = vmul.f32 0.5, %v707
        %v709 = vsub.f32 1.5, %v708
        %v710 = vmul.f32 %v705, %v709
        %vm711 = vweird.f32 %v704
        %vm712 = vweird.f32 %v705
        %vm713 = vmor %vm711, %vm712
        %v714 = vsel %vm713, %v705, %v710
        %v715 = vmul.f32 %v698, %v714
        %v716 = vperm.slane %v183, 6
        %v717 = vmul.f32 %v715, %v716
        %v718 = vperm.slane %v183, 7
        %v719 = vadd.f32 %v717, %v718
        %v720 = vld [vmem:[#allocation3 + $0x20] sm:$0xff]
        %v721 = vld [vmem:[#allocation3 + $0x58] sm:$0xff]
        %v722 = vld [vmem:[#allocation3 + $0x90] sm:$0xff]
        %v723 = vld [vmem:[#allocation3 + $0xc8] sm:$0xff]
        %v724 = vperm.slane %v184, 0
        %v726 = vsel %vm191, %v719, 0
        %728 = vmatpush.msra.mxu0 0.0
        %729 = vmatpush.msra.mxu0 0.0
        %730 = vmatpush.msra.mxu0 0.0
        %731 = vmatpush.msra.mxu0 0.0
        %732 = vmatpush.msra.mxu0 0.0
        %733 = vmatpush.msra.mxu0 0.0
        %734 = vmatpush.msra.mxu0 0.0
        %735 = vmatpush.msra.mxu0 0.0
        %736 = vmatpush.msra.mxu0 0.0
        %737 = vmatpush.msra.mxu0 0.0
        %738 = vmatpush.msra.mxu0 0.0
        %739 = vmatpush.msra.mxu0 0.0
        %740 = vmatpush.msra.mxu0 %v723
        %741 = vmatpush.msra.mxu0 %v722
        %742 = vmatpush.msra.mxu0 %v721
        %743 = vmatpush.msra.mxu0 %v720
        %744 = vmatmul.f32.gmra.mxu0 %v726
        %v745 = vpop.f32.mrf.mxu0
        %v746 = vadd.f32 %v724, %v745
        %747 = vdwg.mxu0
        %v748 = vld [vmem:[#allocation3 + $0x28] sm:$0xff]
        %v749 = vld [vmem:[#allocation3 + $0x60] sm:$0xff]
        %v750 = vld [vmem:[#allocation3 + $0x98] sm:$0xff]
        %v751 = vld [vmem:[#allocation3 + $0xd0] sm:$0xff]
        %v752 = vperm.slane %v184, 1
        %753 = vmatpush.msra.mxu0 0.0
        %754 = vmatpush.msra.mxu0 0.0
        %755 = vmatpush.msra.mxu0 0.0
        %756 = vmatpush.msra.mxu0 0.0
        %757 = vmatpush.msra.mxu0 0.0
        %758 = vmatpush.msra.mxu0 0.0
        %759 = vmatpush.msra.mxu0 0.0
        %760 = vmatpush.msra.mxu0 0.0
        %761 = vmatpush.msra.mxu0 0.0
        %762 = vmatpush.msra.mxu0 0.0
        %763 = vmatpush.msra.mxu0 0.0
        %764 = vmatpush.msra.mxu0 0.0
        %765 = vmatpush.msra.mxu0 %v751
        %766 = vmatpush.msra.mxu0 %v750
        %767 = vmatpush.msra.mxu0 %v749
        %768 = vmatpush.msra.mxu0 %v748
        %769 = vmatmul.f32.gmra.mxu0 %v726
        %v770 = vpop.f32.mrf.mxu0
        %v771 = vadd.f32 %v752, %v770
        %772 = vdwg.mxu0
        %v773 = vsel %vm191, %v771, 0.0
        %v774 = vrot.slane %v773, 4
        %v775 = vadd.f32 %v773, %v774
        %v776 = vrot.slane %v775, 2
        %v777 = vadd.f32 %v775, %v776
        %v778 = vrot.slane %v777, 1
        %v779 = vadd.f32 %v777, %v778
        %v780 = vmul.f32 %v779, %v228
        %v781 = vsub.f32 %v771, %v780
        %v782 = vmul.f32 %v781, %v781
        %v783 = vsel %vm191, %v782, 0.0
        %v784 = vrot.slane %v783, 4
        %v785 = vadd.f32 %v783, %v784
        %v786 = vrot.slane %v785, 2
        %v787 = vadd.f32 %v785, %v786
        %v788 = vrot.slane %v787, 1
        %v789 = vadd.f32 %v787, %v788
        %v790 = vmul.f32 %v789, %v228
        %v791 = vadd.f32 %v790, 1e-05
        %v792 = vrsqrt.pop %v791
        %v793 = vmul.f32 %v792, %v791
        %v794 = vmul.f32 %v793, %v792
        %v795 = vmul.f32 0.5, %v794
        %v796 = vsub.f32 1.5, %v795
        %v797 = vmul.f32 %v792, %v796
        %vm798 = vweird.f32 %v791
        %vm799 = vweird.f32 %v792
        %vm800 = vmor %vm798, %vm799
        %v801 = vsel %vm800, %v792, %v797
        %v802 = vmul.f32 %v781, %v801
        %v803 = vperm.slane %v184, 2
        %v804 = vmul.f32 %v802, %v803
        %v805 = vperm.slane %v184, 3
        %v806 = vadd.f32 %v804, %v805
        %vm807 = vcmp.gt.f32.partialorder %v806, 0.0
        %v808 = vmul.f32 %v806, 0.01
        %v809 = vsel %vm807, %v806, %v808
        %v810 = vld [vmem:[#allocation3 + $0x30] sm:$0xff]
        %v811 = vld [vmem:[#allocation3 + $0x68] sm:$0xff]
        %v812 = vld [vmem:[#allocation3 + $0xa0] sm:$0xff]
        %v813 = vld [vmem:[#allocation3 + $0xd8] sm:$0xff]
        %v814 = vperm.slane %v184, 4
        %v816 = vsel %vm191, %v809, 0
        %818 = vmatpush.msra.mxu0 0.0
        %819 = vmatpush.msra.mxu0 0.0
        %820 = vmatpush.msra.mxu0 0.0
        %821 = vmatpush.msra.mxu0 0.0
        %822 = vmatpush.msra.mxu0 0.0
        %823 = vmatpush.msra.mxu0 0.0
        %824 = vmatpush.msra.mxu0 0.0
        %825 = vmatpush.msra.mxu0 0.0
        %826 = vmatpush.msra.mxu0 0.0
        %827 = vmatpush.msra.mxu0 0.0
        %828 = vmatpush.msra.mxu0 0.0
        %829 = vmatpush.msra.mxu0 0.0
        %830 = vmatpush.msra.mxu0 %v813
        %831 = vmatpush.msra.mxu0 %v812
        %832 = vmatpush.msra.mxu0 %v811
        %833 = vmatpush.msra.mxu0 %v810
        %834 = vmatmul.f32.gmra.mxu0 %v816
        %v835 = vpop.f32.mrf.mxu0
        %v836 = vadd.f32 %v814, %v835
        %837 = vdwg.mxu0
        %839 = vrot.lane.b32.xlu0 %v836, 16
        %v840 = vpop.permute.xlu0 %839
        %v842 = vsel %vm569, %v746, %v840
        %vm843 = vcmask 392192
        %844 = vst.msk [vmem:[%s182] sm:$0xff] %vm843, %v842
        %p845 = scmp.lt.s32.totalorder %s15, 3
        %s846 = scalar_select %p845, %s15, 3
        %s847 = smul.addr %s846, 8
        %s848 = scalar_lea.vmem %s3, %s847
        // Predicated region
        $region37: #{encoder_connection_forward.1} parent=31 // pred_check
          %p849 = pneg %p101
        $region38: #{encoder_connection_forward.1} parent=31 // pred_check_branch
          %851 = sbr.rel (%p849) target = $region40
        $region39: #{encoder_connection_forward.1} parent=31 // pred_region
          _
        $region40: #{encoder_connection_forward.1} parent=31 // pred_fallthru
          _
      $region32: #{encoder_connection_forward.1} parent=5 // pred_fallthru
        _
      %p852 = scmp.le.s32.totalorder 2, %s10
      // Predicated region
      $region41: #{encoder_connection_forward.1} parent=5 // pred_check
        %p853 = pneg %p852
      $region42: #{encoder_connection_forward.1} parent=5 // pred_check_branch
        %855 = sbr.rel (%p853) target = $region44
      $region43: #{encoder_connection_forward.1} parent=5 // pred_region
        %s856 = ssub.s32 %s10, 2
        // Predicated region
        $region45: #{encoder_connection_forward.1} parent=43 // pred_check
          %p857 = pneg %p107
        $region46: #{encoder_connection_forward.1} parent=43 // pred_check_branch
          %859 = sbr.rel (%p857) target = $region48
        $region47: #{encoder_connection_forward.1} parent=43 // pred_region
          %p860 = scmp.lt.s32.totalorder %s16, 3
          %s861 = scalar_select %p860, %s16, 3
          %s862 = smul.addr %s861, 8
          %s863 = scalar_lea.vmem %s3, %s862
        $region48: #{encoder_connection_forward.1} parent=43 // pred_fallthru
          _
      $region44: #{encoder_connection_forward.1} parent=5 // pred_fallthru
        _
    $region6: #{encoder_connection_forward.1} parent=1 // loop_footer
      %s14 = sadd.s32 1, %s10
    $region7: #{encoder_connection_forward.1} parent=1 // loop_footer_branch
      %9 = sbr.rel target = $region3
    $region8: #{encoder_connection_forward.1} parent=1 // loop_exit
      _
    %864 = vsyncpa [#allocation4], 1
    %s865 = scalar_lea.sflag [#allocation4], 1
    %866 = vsyncpa %s865, 1

</llo_original>
